<compile_context>
chip_gen: v7x
topology: tpu7x:2x2x1
jax: 0.10.0
libtpu: 0.0.40
codegen_flags: <defaults>
</compile_context>

<pallas_src>
import functools

import jax
import jax.numpy as jnp
from jax.experimental import pallas as pl
from jax.experimental.pallas import tpu as pltpu


def _distill_kl_kernel(ys_ref, yt_ref, row_ref, *, inv_temperature):
    # Upcast inside the kernel: bf16 logits stream at half the HBM bytes and
    # all math is f32 regardless of input dtype.
    s = ys_ref[...].astype(jnp.float32)
    t = yt_ref[...].astype(jnp.float32)

    # Row maxes on the raw logits (max(x/T) = max(x)/T, T > 0), so the 1/T
    # scale fuses into the shift and no separately scaled copy is kept live.
    s_max = jnp.max(s, axis=-1, keepdims=True)            # (tb, 1)
    t_max = jnp.max(t, axis=-1, keepdims=True)            # (tb, 1)
    s_shift = (s - s_max) * inv_temperature                # (tb, C) shifted log-space
    t_shift = (t - t_max) * inv_temperature                # (tb, C)
    d = t_shift - s_shift                                  # (tb, C)

    s_sum = jnp.sum(jnp.exp(s_shift), axis=-1, keepdims=True)   # (tb, 1)
    t_exp = jnp.exp(t_shift)                                     # (tb, C)
    t_sum = jnp.sum(t_exp, axis=-1, keepdims=True)               # (tb, 1)

    # KL row sum with the per-row scalar (lse) terms hoisted OUT of the
    # C-wide sum:
    #   sum_c p_t * (log_p_t - log_p_s)
    #     = [sum_c t_exp * (t_shift - s_shift)] / t_sum + (log s_sum - log t_sum)
    a = jnp.sum(t_exp * d, axis=-1, keepdims=True)               # (tb, 1)
    row_ref[...] = (a * pl.reciprocal(t_sum, approx=False)
                    + (jnp.log(s_sum) - jnp.log(t_sum)))


def _vmem_limit_bytes():
    """~75%+ of physical VMEM: ~48 MiB on v7x (64 MiB/TC), ~100 MiB on v5e/v6e."""
    try:
        cap = int(pltpu.get_tpu_info().vmem_capacity_bytes)
    except Exception:
        cap = 64 << 20                      # conservative fallback (v7x per-TC)
    return int(min(max(cap - (16 << 20), 32 << 20), 100 << 20))


def _per_row_vmem_bytes(C, itemsize):
    # 2 operands x 2 pipeline buffers (input dtype) + ~5 live f32 C-wide
    # temporaries inside the kernel body (shifts, exp, product).
    return 2 * 2 * C * itemsize + 5 * C * 4


def _choose_row_tile(B, C, itemsize, vmem_limit_bytes):
    """Pick the row tile tb.

    * ~6 MiB of input per operand per block (itemsize-aware) — big blocks
      pipeline far better (128-wide tiles ~29% of HBM roofline vs ~85% at 512+).
    * Double-buffered inputs + f32 temporaries stay within ~85% of the VMEM
      limit (48 MiB on v7x, ~100 MiB on v5e/v6e).
    * For B >= 64, never collapse to one block: at least 4 grid steps, rounded
      to an even count, so DMA overlaps compute and both v7x cores get work.
    """
    tb_vmem = int(vmem_limit_bytes * 0.85) // _per_row_vmem_bytes(C, itemsize)
    tb_dma = (6 << 20) // max(C * itemsize, 1)
    tb_cap = min(tb_vmem, tb_dma, 4096)
    tb_cap = max(8, (tb_cap // 8) * 8)          # sublane-aligned

    if B < 64:
        return min(B, tb_cap)                   # tiny batch: single block

    steps = max(4, -(-B // tb_cap))             # >= 4 steps for overlap
    if steps % 2:
        steps += 1                              # even count: megacore balance
    tb = -(-B // steps)
    tb = -(-tb // 8) * 8                        # round up to sublane multiple
    return max(8, min(tb, tb_cap))


def distill_kl(y_s, y_t, T, is_ca=False, *, tb=None):
    """JAX/Pallas equivalent of DistillKL(T)(y_s, y_t, is_ca)."""
    assert y_s.shape == y_t.shape and y_s.ndim == 2
    B, C = y_s.shape
    itemsize = max(jnp.dtype(y_s.dtype).itemsize, jnp.dtype(y_t.dtype).itemsize)
    vmem_limit = _vmem_limit_bytes()

    if tb is None:
        tb = _choose_row_tile(B, C, itemsize, vmem_limit)
    else:
        # Gracefully shrink an oversized user tile instead of VMEM-OOMing.
        tb_vmem_max = max(8, int(vmem_limit * 0.9) // _per_row_vmem_bytes(C, itemsize))
        tb = int(min(tb, B, tb_vmem_max))
        if tb < B and tb % 8:
            tb = max(8, (tb // 8) * 8)
    tb = max(1, min(int(tb), B))
    grid = (pl.cdiv(B, tb),)

    # TODO(synk): for vocab-scale C (>= ~32k), tile the class axis on a second
    # "arbitrary" grid dim with an online logsumexp accumulator; full (tb, C)
    # rows stop fitting v7x's 64 MiB VMEM around C ~ 128k even at tb = 8.

    kernel = functools.partial(_distill_kl_kernel, inv_temperature=1.0 / float(T))

    row_kl = pl.pallas_call(
        kernel,
        out_shape=jax.ShapeDtypeStruct((B, 1), jnp.float32),
        grid_spec=pltpu.PrefetchScalarGridSpec(
            num_scalar_prefetch=0,
            grid=grid,
            in_specs=[
                # (If DMA latency is still exposed on v5e for small C, these
                # could take pipeline_mode=pl.Buffered(3).)
                pl.BlockSpec((tb, C), lambda i: (i, 0)),
                pl.BlockSpec((tb, C), lambda i: (i, 0)),
            ],
            # (tb, 1) column output: writeback bytes are 4 B/row vs
            # 2*C*itemsize of input per row, negligible with large tiles.
            out_specs=pl.BlockSpec((tb, 1), lambda i: (i, 0)),
        ),
        compiler_params=pltpu.CompilerParams(
            dimension_semantics=("parallel",),
            vmem_limit_bytes=vmem_limit,
        ),
    )(y_s, y_t)

    t_sq = jnp.float32(T) ** 2
    if is_ca:
        # (KLDivLoss(reduction='none') * T**2).sum(-1)  -> shape (B,)
        return row_kl[:, 0] * t_sq
    # KLDivLoss(reduction='batchmean') * T**2           -> scalar
    return jnp.sum(row_kl) / jnp.float32(B) * t_sq


if __name__ == "__main__":
    key = jax.random.PRNGKey(0)
    k_s, k_t, k_s2, k_t2 = jax.random.split(key, 4)
    T = 4.0

    # Pure-JAX reference (same math as the PyTorch module).
    def ref(ys, yt, temp, is_ca):
        ls = jax.nn.log_softmax(ys.astype(jnp.float32) / temp, axis=1)
        pt = jax.nn.softmax(yt.astype(jnp.float32) / temp, axis=1)
        lt = jax.nn.log_softmax(yt.astype(jnp.float32) / temp, axis=1)
        kl = pt * (lt - ls)
        if is_ca:
            return (kl * temp ** 2).sum(-1)
        return kl.sum() / ys.shape[0] * temp ** 2

    # Small logits: batch=16, classes=128 (single-block path).
    B, C = 16, 128
    y_s = jax.random.normal(k_s, (B, C), dtype=jnp.float32)
    y_t = jax.random.normal(k_t, (B, C), dtype=jnp.float32)
    loss_batchmean = distill_kl(y_s, y_t, T, is_ca=False)
    loss_per_row = distill_kl(y_s, y_t, T, is_ca=True)
    jax.block_until_ready((loss_batchmean, loss_per_row))
    assert jnp.allclose(loss_batchmean, ref(y_s, y_t, T, False), rtol=1e-3, atol=1e-4)
    assert jnp.allclose(loss_per_row, ref(y_s, y_t, T, True), rtol=1e-3, atol=1e-4)

    # Multi-block path with a ragged last tile (exercises the >=4-step grid).
    B2, C2 = 250, 384
    y_s2 = jax.random.normal(k_s2, (B2, C2), dtype=jnp.float32)
    y_t2 = jax.random.normal(k_t2, (B2, C2), dtype=jnp.float32)
    loss2 = distill_kl(y_s2, y_t2, T, is_ca=False)
    loss2_rows = distill_kl(y_s2, y_t2, T, is_ca=True)
    jax.block_until_ready((loss2, loss2_rows))
    assert jnp.allclose(loss2, ref(y_s2, y_t2, T, False), rtol=1e-3, atol=1e-4)
    assert jnp.allclose(loss2_rows, ref(y_s2, y_t2, T, True), rtol=1e-3, atol=1e-4)

    # bf16 logits path: halves HBM traffic; kernel upcasts internally.
    loss_bf16 = distill_kl(y_s.astype(jnp.bfloat16), y_t.astype(jnp.bfloat16), T)
    jax.block_until_ready(loss_bf16)

    print("KERNEL_OK")
</pallas_src>

<mosaic_0001>
module attributes {stable_mosaic.version = 11 : i64} {
  func.func @_distill_kl_kernel(%arg0: i32, %arg1: memref<16x128xf32, #tpu.memory_space<vmem>>, %arg2: memref<16x128xf32, #tpu.memory_space<vmem>>, %arg3: memref<16x1xf32, #tpu.memory_space<vmem>>) attributes {dimension_semantics = [#tpu.dimension_semantics<parallel>], iteration_bounds = array<i64: 1>, scalar_prefetch = 0 : i64, scratch_operands = 0 : i64, tpu.core_type = #tpu.core_type<tc>, window_params = [{transform_indices = @transform_0, window_bounds = array<i64: 16, 128>}, {transform_indices = @transform_1, window_bounds = array<i64: 16, 128>}, {transform_indices = @transform_2, window_bounds = array<i64: 16, 1>}]} {
    %c0 = arith.constant 0 : index
    %c0_0 = arith.constant 0 : index
    %0 = vector.load %arg1[%c0, %c0_0] : memref<16x128xf32, #tpu.memory_space<vmem>>, vector<16x128xf32>
    %c0_1 = arith.constant 0 : index
    %c0_2 = arith.constant 0 : index
    %1 = vector.load %arg2[%c0_1, %c0_2] : memref<16x128xf32, #tpu.memory_space<vmem>>, vector<16x128xf32>
    %cst = arith.constant dense<0xFF800000> : vector<16xf32>
    %2 = vector.multi_reduction <maximumf>, %0, %cst [1] : vector<16x128xf32> to vector<16xf32>
    %3 = vector.shape_cast %2 : vector<16xf32> to vector<16x1xf32>
    %cst_3 = arith.constant dense<0xFF800000> : vector<16xf32>
    %4 = vector.multi_reduction <maximumf>, %1, %cst_3 [1] : vector<16x128xf32> to vector<16xf32>
    %5 = vector.shape_cast %4 : vector<16xf32> to vector<16x1xf32>
    %6 = vector.broadcast %3 : vector<16x1xf32> to vector<16x128xf32>
    %7 = arith.subf %0, %6 : vector<16x128xf32>
    %cst_4 = arith.constant 2.500000e-01 : f32
    %8 = vector.broadcast %cst_4 : f32 to vector<16x128xf32>
    %9 = arith.mulf %7, %8 : vector<16x128xf32>
    %10 = vector.broadcast %5 : vector<16x1xf32> to vector<16x128xf32>
    %11 = arith.subf %1, %10 : vector<16x128xf32>
    %cst_5 = arith.constant 2.500000e-01 : f32
    %12 = vector.broadcast %cst_5 : f32 to vector<16x128xf32>
    %13 = arith.mulf %11, %12 : vector<16x128xf32>
    %14 = arith.subf %13, %9 : vector<16x128xf32>
    %15 = math.exp %9 : vector<16x128xf32>
    %cst_6 = arith.constant dense<0.000000e+00> : vector<16xf32>
    %16 = vector.multi_reduction <add>, %15, %cst_6 [1] : vector<16x128xf32> to vector<16xf32>
    %17 = vector.shape_cast %16 : vector<16xf32> to vector<16x1xf32>
    %18 = math.exp %13 : vector<16x128xf32>
    %cst_7 = arith.constant dense<0.000000e+00> : vector<16xf32>
    %19 = vector.multi_reduction <add>, %18, %cst_7 [1] : vector<16x128xf32> to vector<16xf32>
    %20 = vector.shape_cast %19 : vector<16xf32> to vector<16x1xf32>
    %21 = arith.mulf %18, %14 : vector<16x128xf32>
    %cst_8 = arith.constant dense<0.000000e+00> : vector<16xf32>
    %22 = vector.multi_reduction <add>, %21, %cst_8 [1] : vector<16x128xf32> to vector<16xf32>
    %23 = vector.shape_cast %22 : vector<16xf32> to vector<16x1xf32>
    %24 = tpu.reciprocal %20 : vector<16x1xf32> -> vector<16x1xf32>
    %25 = arith.mulf %23, %24 : vector<16x1xf32>
    %26 = math.log %17 : vector<16x1xf32>
    %27 = math.log %20 : vector<16x1xf32>
    %28 = arith.subf %26, %27 : vector<16x1xf32>
    %29 = arith.addf %25, %28 : vector<16x1xf32>
    %c0_9 = arith.constant 0 : index
    %c0_10 = arith.constant 0 : index
    %30 = vector.load %arg3[%c0_9, %c0_10] : memref<16x1xf32, #tpu.memory_space<vmem>>, vector<16x1xf32>
    tpu.vector_store %arg3[%c0_9, %c0_10], %29 {strides = array<i32>} : memref<16x1xf32, #tpu.memory_space<vmem>>, vector<16x1xf32>,
    return
  }
  func.func @transform_0(%arg0: i32) -> (i32, i32) {
    %c0_i32 = arith.constant 0 : i32
    %c0_i32_0 = arith.constant 0 : i32
    return %arg0, %c0_i32 : i32, i32
  }
  func.func @transform_1(%arg0: i32) -> (i32, i32) {
    %c0_i32 = arith.constant 0 : i32
    %c0_i32_0 = arith.constant 0 : i32
    return %arg0, %c0_i32 : i32, i32
  }
  func.func @transform_2(%arg0: i32) -> (i32, i32) {
    %c0_i32 = arith.constant 0 : i32
    %c0_i32_0 = arith.constant 0 : i32
    return %arg0, %c0_i32 : i32, i32
  }
}

</mosaic_0001>

<llo_original>
// kernel: tpu_custom_call.1
$region0: #{tpu_custom_call.1}
  #allocation0 [shape = 'u32[]', space=smem, size = 0x4, offset = 0x4, fixed_abs, tag = 'smem constant byte address 0x4 - core index']
  #allocation1 [shape = 'u32[144,128]{1,0:T(1,128)}', space=vmem, size = 0x12000, scoped, tag = 'internal scratch']
  %s0 = inlined_call_operand.hbm [shape: f32[16,128], index: 0, kind: input, shape index: {}]
  %s1 = inlined_call_operand.hbm [shape: f32[16,128], index: 1, kind: input, shape index: {}]
  %s2 = inlined_call_operand.vmem [shape: f32[16,1], index: 2, kind: output, shape index: {}]
  %s3 = sld [smem:[#allocation0]]
  $region26: #{tpu_custom_call.1} parent=0
    _
  %s5 = ssub.s32 1, %s3
  %s6 = scalar_select 0, %s5, %s3
  $region1: #{tpu_custom_call.1} parent=0
    #allocation2 [shape = 'u8[8192]{0}', space=vmem, size = 0x2000, scoped, tag = 'input window, operand 0, single buffered']
    #allocation3 [shape = 's32[1]{0}', space=sflag, size = 0x4, scoped, tag = 'scoped memory for tpu_custom_call.1']
    #allocation4 [shape = 'u8[8192]{0}', space=vmem, size = 0x2000, scoped, tag = 'input window, operand 1, single buffered']
    #allocation5 [shape = 's32[1]{0}', space=sflag, size = 0x4, scoped, tag = 'scoped memory for tpu_custom_call.1']
    %7 = vsyncpa [#allocation3], 0
    %8 = vsyncpa [#allocation5], 0
    // Predicated region
    $region2: #{tpu_custom_call.1} parent=1 // pred_check
      _
    $region3: #{tpu_custom_call.1} parent=1 // pred_check_branch
      %10 = sbr.rel (0) target = $region5
    $region4: #{tpu_custom_call.1} parent=1 // pred_region
      %s12 = ssub.s32 256, 256
      %13 = vsyncadd [#allocation3], %s12
      %s14 = sshll.u32 [#allocation2], 4
      %s15 = int_to_ptr.vmem [resolvable:$true] %s14
      %20 = dma.hbm_to_vmem [thread:$0]  %s0, 256, %s15, [#allocation3], 128, 128, 8
    $region5: #{tpu_custom_call.1} parent=1 // pred_fallthru
      _
    // Predicated region
    $region6: #{tpu_custom_call.1} parent=1 // pred_check
      _
    $region7: #{tpu_custom_call.1} parent=1 // pred_check_branch
      %22 = sbr.rel (0) target = $region9
    $region8: #{tpu_custom_call.1} parent=1 // pred_region
      %s24 = ssub.s32 256, 256
      %25 = vsyncadd [#allocation5], %s24
      %s26 = sshll.u32 [#allocation4], 4
      %s27 = int_to_ptr.vmem [resolvable:$true] %s26
      %32 = dma.hbm_to_vmem [thread:$0]  %s1, 256, %s27, [#allocation5], 128, 128, 8
    $region9: #{tpu_custom_call.1} parent=1 // pred_fallthru
      _
    // Predicated region
    $region10: #{tpu_custom_call.1} parent=1 // pred_check
      _
    $region11: #{tpu_custom_call.1} parent=1 // pred_check_branch
      %34 = sbr.rel (0) target = $region13
    $region12: #{tpu_custom_call.1} parent=1 // pred_region
      %35 = dma.done [#allocation3], 256
    $region13: #{tpu_custom_call.1} parent=1 // pred_fallthru
      _
    // Predicated region
    $region14: #{tpu_custom_call.1} parent=1 // pred_check
      _
    $region15: #{tpu_custom_call.1} parent=1 // pred_check_branch
      %37 = sbr.rel (0) target = $region17
    $region16: #{tpu_custom_call.1} parent=1 // pred_region
      %38 = dma.done [#allocation5], 256
    $region17: #{tpu_custom_call.1} parent=1 // pred_fallthru
      _
    %v39 = vld [vmem:[#allocation2] sm:$0xff]
    %v40 = vld [vmem:[#allocation2 + $0x8] sm:$0xff]
    %v41 = vld [vmem:[#allocation4] sm:$0xff]
    %v42 = vld [vmem:[#allocation4 + $0x8] sm:$0xff]
    %43 = vmax.xlane.f32.xlu0 %v39
    %v44 = vpop.xlane.xlu0 %43
    %45 = vmax.xlane.f32.xlu0 %v40
    %v46 = vpop.xlane.xlu0 %45
    %47 = vmax.xlane.f32.xlu0 %v41
    %v48 = vpop.xlane.xlu0 %47
    %49 = vmax.xlane.f32.xlu0 %v42
    %v50 = vpop.xlane.xlu0 %49
    %v51 = vsub.f32 %v39, %v44
    %v52 = vsub.f32 %v40, %v46
    %v53 = vmul.f32 %v51, 0.25
    %v54 = vmul.f32 %v52, 0.25
    %v55 = vsub.f32 %v41, %v48
    %v56 = vsub.f32 %v42, %v50
    %v57 = vmul.f32 %v55, 0.25
    %v58 = vmul.f32 %v56, 0.25
    %v59 = vsub.f32 %v57, %v53
    %v60 = vsub.f32 %v58, %v54
    %v61 = vmul.f32 %v53, 1.442695
    %v62 = vpow.pop %v61
    %v63 = vmul.f32 %v54, 1.442695
    %v64 = vpow.pop %v63
    %65 = vadd.xlane.f32.xlu0 %v62
    %v66 = vpop.xlane.xlu0 %65
    %67 = vadd.xlane.f32.xlu0 %v64
    %v68 = vpop.xlane.xlu0 %67
    %v69 = vmul.f32 %v57, 1.442695
    %v70 = vpow.pop %v69
    %v71 = vmul.f32 %v58, 1.442695
    %v72 = vpow.pop %v71
    %73 = vadd.xlane.f32.xlu0 %v70
    %v74 = vpop.xlane.xlu0 %73
    %75 = vadd.xlane.f32.xlu0 %v72
    %v76 = vpop.xlane.xlu0 %75
    %v77 = vmul.f32 %v70, %v59
    %v78 = vmul.f32 %v72, %v60
    %79 = vadd.xlane.f32.xlu0 %v77
    %v80 = vpop.xlane.xlu0 %79
    %81 = vadd.xlane.f32.xlu0 %v78
    %v82 = vpop.xlane.xlu0 %81
    %v83 = vrcp.pop %v74
    %v84 = vrcp.pop %v76
    %v85 = vmul.f32 %v80, %v83
    %v86 = vmul.f32 %v82, %v84
    %v87 = vlog2.pop %v66
    %v88 = vmul.f32 %v87, 0.6931472
    %v89 = vlog2.pop %v68
    %v90 = vmul.f32 %v89, 0.6931472
    %v91 = vlog2.pop %v74
    %v92 = vmul.f32 %v91, 0.6931472
    %v93 = vlog2.pop %v76
    %v94 = vmul.f32 %v93, 0.6931472
    %v95 = vsub.f32 %v88, %v92
    %v96 = vsub.f32 %v90, %v94
    %v97 = vadd.f32 %v85, %v95
    %v98 = vadd.f32 %v86, %v96
    %vm99 = vcmask 7168
    %100 = vst.msk [vmem:[%s2] sm:$0xff] %vm99, %v97
    %101 = vst.msk [vmem:[%s2 + $0x8] sm:$0xff] %vm99, %v98
    // Predicated region
    $region18: #{tpu_custom_call.1} parent=1 // pred_check
      _
    $region19: #{tpu_custom_call.1} parent=1 // pred_check_branch
      %103 = sbr.rel (0) target = $region21
    $region20: #{tpu_custom_call.1} parent=1 // pred_region
      _
    $region21: #{tpu_custom_call.1} parent=1 // pred_fallthru
      _
    // Predicated region
    $region22: #{tpu_custom_call.1} parent=1 // pred_check
      _
    $region23: #{tpu_custom_call.1} parent=1 // pred_check_branch
      %105 = sbr.rel (0) target = $region25
    $region24: #{tpu_custom_call.1} parent=1 // pred_region
      _
    $region25: #{tpu_custom_call.1} parent=1 // pred_fallthru
      _
    %106 = vsyncpa [#allocation3], 1
    %107 = vsyncpa [#allocation5], 1

</llo_original>
